<compile_context>
chip_gen: v7x
topology: tpu7x:2x2x1
jax: 0.10.0
libtpu: 0.0.40
codegen_flags: <defaults>
</compile_context>

<pallas_src>
import jax
import jax.numpy as jnp
from jax.experimental import pallas as pl
from jax.experimental.pallas import tpu as pltpu


def _f32_block_vmem_bytes(shape):
    """VMEM footprint of a 2-D f32 block after (8, 128) tile padding."""
    rows, cols = shape
    return ((rows + 7) // 8 * 8) * ((cols + 127) // 128 * 128) * 4


def _make_spacenet_kernel(scale: float, lam: float, beta: float,
                          N: int, D: int, H: int):
    inv_two_scale_sq = 1.0 / (2.0 * scale * scale)
    # The regularizer partial is only added on the first column tile of each
    # row tile, scaled so that   loss = sum(tile_partials) / N^2
    # equals  sum(diff^2)/N^2 + lam * sum(p^2)/(N*H).
    reg_coeff = lam * float(N) / float(H)

    def kernel(r_ref, rT_ref, p_ref, pT_ref, corr_ref, sim_ref, part_ref):
        r_row = r_ref[...]        # [TM, D]  f32 (row block of positions)
        r_colT = rT_ref[...]      # [D, TN]  f32 (column block, pre-transposed)
        p_row = p_ref[...]        # [TM, H]  f32
        p_colT = pT_ref[...]      # [H, TN]  f32 (pre-transposed)

        # --- pairwise squared distance: unrolled over D, pure VPU broadcasts.
        #     Exact (direct-difference) form; no clamp needed.
        d2 = None
        for d in range(D):
            delta = r_row[:, d:d + 1] - r_colT[d:d + 1, :]        # [TM, TN]
            sq = delta * delta
            d2 = sq if d2 is None else d2 + sq

        corr = beta + (1.0 - beta) * jnp.exp(-d2 * inv_two_scale_sq)
        corr_ref[...] = corr

        # --- similarity tile on the MXU (f32 accumulation).
        sim = jnp.dot(p_row, p_colT, preferred_element_type=jnp.float32)
        sim_ref[...] = sim

        # --- per-tile loss partial (scalar, replicated into a dense block).
        diff = corr - sim
        mse_part = jnp.sum(diff * diff, keepdims=True)            # (1, 1)
        reg_part = jnp.sum(p_row * p_row, keepdims=True)          # (1, 1)
        reg_gate = jnp.where(pl.program_id(1) == 0, reg_coeff, 0.0)
        tile_partial = mse_part + reg_gate * reg_part             # (1, 1)
        # Replicate to a full (8, 128) block: lane-dense, alignment-legal store.
        part_ref[...] = jnp.broadcast_to(tile_partial, (8, 128))

    return kernel


def spacenet_pallas(r, p, *, scale=0.25, lam=0.1, beta=0.5, tile=128):
    """Fused SpaceNet correlation / similarity / loss.

    Returns (corr [N,N], sim [N,N], loss [1,1]), matching the monolithic
    reference semantics.
    """
    r = r.astype(jnp.float32)
    p = p.astype(jnp.float32)
    N, D = r.shape
    N2, H = p.shape
    assert N == N2, "r and p must have the same number of samples"

    # Tile the N x N output; fall back to one full-extent block for toy N that
    # is not a multiple of the preferred tile.
    tm = tile if N % tile == 0 else N
    tn = tm
    gm, gn = N // tm, N // tn

    kernel = _make_spacenet_kernel(scale, lam, beta, N, D, H)

    # Column-direction operands are passed pre-transposed (tiny XLA transposes
    # in the wrapper) so the kernel uses plain row-major broadcasts / matmuls
    # with no in-kernel XLU transposes.
    rT = r.T      # [D, N]
    pT = p.T      # [H, N]

    # Derive the VMEM budget from the actual (double-buffered) block sizes.
    block_shapes = [(tm, D), (D, tn), (tm, H), (H, tn),
                    (tm, tn), (tm, tn), (8, 128)]
    vmem_need = 2 * sum(_f32_block_vmem_bytes(s) for s in block_shapes)
    vmem_limit = int(min(max(4 * vmem_need, 16 << 20), 64 << 20))

    corr, sim, partials = pl.pallas_call(
        kernel,
        out_shape=(
            jax.ShapeDtypeStruct((N, N), jnp.float32),          # correlation
            jax.ShapeDtypeStruct((N, N), jnp.float32),          # p @ p^T
            jax.ShapeDtypeStruct((gm * 8, gn * 128), jnp.float32),  # partials
        ),
        grid=(gm, gn),
        in_specs=[
            pl.BlockSpec((tm, D), lambda i, j: (i, 0)),   # r rows
            pl.BlockSpec((D, tn), lambda i, j: (0, j)),   # r^T cols
            pl.BlockSpec((tm, H), lambda i, j: (i, 0)),   # p rows
            pl.BlockSpec((H, tn), lambda i, j: (0, j)),   # p^T cols
        ],
        out_specs=(
            pl.BlockSpec((tm, tn), lambda i, j: (i, j)),
            pl.BlockSpec((tm, tn), lambda i, j: (i, j)),
            pl.BlockSpec((8, 128), lambda i, j: (i, j)),
        ),
        compiler_params=pltpu.CompilerParams(
            dimension_semantics=("parallel", "parallel"),
            vmem_limit_bytes=vmem_limit,
        ),
    )(r, rT, p, pT)

    # Each (8,128) partial block replicates one per-tile scalar: pick one copy
    # per tile and finish the (tiny) reduction + normalization here.
    tile_scalars = partials[::8, ::128]                        # (gm, gn)
    loss = (jnp.sum(tile_scalars) / float(N * N)).reshape(1, 1)
    return corr, sim, loss


def spacenet_reference(r, p, *, scale=0.25, lam=0.1, beta=0.5):
    """Pure-JAX reference for correctness checking."""
    r = r.astype(jnp.float32)
    p = p.astype(jnp.float32)
    d2 = jnp.sum((r[:, None, :] - r[None, :, :]) ** 2, axis=-1)
    corr = beta + (1.0 - beta) * jnp.exp(-d2 / (2.0 * scale * scale))
    sim = p @ p.T
    loss = jnp.mean((corr - sim) ** 2) + lam * jnp.mean(p * p)
    return corr, sim, loss.reshape(1, 1)


if __name__ == "__main__":
    # Small deterministic inputs: N=256 samples (multiple of 128 -> lane-dense
    # 128x128 tiles, grid=(2,2)), D=2 spatial coords, H=32 hidden units.
    N, D, H = 256, 2, 32
    key = jax.random.PRNGKey(0)
    kr, kp = jax.random.split(key)
    r = jax.random.uniform(kr, (N, D), dtype=jnp.float32)          # positions
    p = 0.1 * jax.random.normal(kp, (N, H), dtype=jnp.float32)     # representations

    corr, sim, loss = jax.block_until_ready(
        spacenet_pallas(r, p, scale=0.25, lam=0.1, beta=0.5))

    corr_ref, sim_ref, loss_ref = spacenet_reference(
        r, p, scale=0.25, lam=0.1, beta=0.5)

    assert jnp.allclose(corr, corr_ref, atol=1e-5, rtol=1e-5)
    assert jnp.allclose(sim, sim_ref, atol=1e-5, rtol=1e-5)
    assert jnp.allclose(loss, loss_ref, atol=1e-5, rtol=1e-5)

    print("KERNEL_OK")
</pallas_src>

<mosaic_0001>
module attributes {stable_mosaic.version = 11 : i64} {
  func.func @kernel(%arg0: i32, %arg1: i32, %arg2: memref<128x2xf32, #tpu.memory_space<vmem>>, %arg3: memref<2x128xf32, #tpu.memory_space<vmem>>, %arg4: memref<128x32xf32, #tpu.memory_space<vmem>>, %arg5: memref<32x128xf32, #tpu.memory_space<vmem>>, %arg6: memref<128x128xf32, #tpu.memory_space<vmem>>, %arg7: memref<128x128xf32, #tpu.memory_space<vmem>>, %arg8: memref<8x128xf32, #tpu.memory_space<vmem>>) attributes {dimension_semantics = [#tpu.dimension_semantics<parallel>, #tpu.dimension_semantics<parallel>], iteration_bounds = array<i64: 2, 2>, scalar_prefetch = 0 : i64, scratch_operands = 0 : i64, tpu.core_type = #tpu.core_type<tc>, window_params = [{transform_indices = @transform_0, window_bounds = array<i64: 128, 2>}, {transform_indices = @transform_1, window_bounds = array<i64: 2, 128>}, {transform_indices = @transform_2, window_bounds = array<i64: 128, 32>}, {transform_indices = @transform_3, window_bounds = array<i64: 32, 128>}, {transform_indices = @transform_4, window_bounds = array<i64: 128, 128>}, {transform_indices = @transform_5, window_bounds = array<i64: 128, 128>}, {transform_indices = @transform_6, window_bounds = array<i64: 8, 128>}]} {
    %c0 = arith.constant 0 : index
    %c0_0 = arith.constant 0 : index
    %0 = vector.load %arg2[%c0, %c0_0] : memref<128x2xf32, #tpu.memory_space<vmem>>, vector<128x2xf32>
    %c0_1 = arith.constant 0 : index
    %c0_2 = arith.constant 0 : index
    %1 = vector.load %arg3[%c0_1, %c0_2] : memref<2x128xf32, #tpu.memory_space<vmem>>, vector<2x128xf32>
    %c0_3 = arith.constant 0 : index
    %c0_4 = arith.constant 0 : index
    %2 = vector.load %arg4[%c0_3, %c0_4] : memref<128x32xf32, #tpu.memory_space<vmem>>, vector<128x32xf32>
    %c0_5 = arith.constant 0 : index
    %c0_6 = arith.constant 0 : index
    %3 = vector.load %arg5[%c0_5, %c0_6] : memref<32x128xf32, #tpu.memory_space<vmem>>, vector<32x128xf32>
    %4 = vector.extract_strided_slice %0 {offsets = [0, 0], sizes = [128, 1], strides = [1, 1]} : vector<128x2xf32> to vector<128x1xf32>
    %5 = vector.extract_strided_slice %1 {offsets = [0, 0], sizes = [1, 128], strides = [1, 1]} : vector<2x128xf32> to vector<1x128xf32>
    %6 = vector.broadcast %4 : vector<128x1xf32> to vector<128x128xf32>
    %7 = vector.broadcast %5 : vector<1x128xf32> to vector<128x128xf32>
    %8 = arith.subf %6, %7 : vector<128x128xf32>
    %9 = arith.mulf %8, %8 : vector<128x128xf32>
    %10 = vector.extract_strided_slice %0 {offsets = [0, 1], sizes = [128, 1], strides = [1, 1]} : vector<128x2xf32> to vector<128x1xf32>
    %11 = vector.extract_strided_slice %1 {offsets = [1, 0], sizes = [1, 128], strides = [1, 1]} : vector<2x128xf32> to vector<1x128xf32>
    %12 = vector.broadcast %10 : vector<128x1xf32> to vector<128x128xf32>
    %13 = vector.broadcast %11 : vector<1x128xf32> to vector<128x128xf32>
    %14 = arith.subf %12, %13 : vector<128x128xf32>
    %15 = arith.mulf %14, %14 : vector<128x128xf32>
    %16 = arith.addf %9, %15 : vector<128x128xf32>
    %cst = arith.constant 0.000000e+00 : f32
    %17 = vector.broadcast %cst : f32 to vector<128x128xf32>
    %18 = arith.subf %17, %16 : vector<128x128xf32>
    %cst_7 = arith.constant 8.000000e+00 : f32
    %19 = vector.broadcast %cst_7 : f32 to vector<128x128xf32>
    %20 = arith.mulf %18, %19 : vector<128x128xf32>
    %21 = math.exp %20 : vector<128x128xf32>
    %cst_8 = arith.constant 5.000000e-01 : f32
    %22 = vector.broadcast %cst_8 : f32 to vector<128x128xf32>
    %23 = arith.mulf %22, %21 : vector<128x128xf32>
    %cst_9 = arith.constant 5.000000e-01 : f32
    %24 = vector.broadcast %cst_9 : f32 to vector<128x128xf32>
    %25 = arith.addf %24, %23 : vector<128x128xf32>
    %c0_10 = arith.constant 0 : index
    %c0_11 = arith.constant 0 : index
    %26 = vector.load %arg6[%c0_10, %c0_11] : memref<128x128xf32, #tpu.memory_space<vmem>>, vector<128x128xf32>
    tpu.vector_store %arg6[%c0_10, %c0_11], %25 {strides = array<i32>} : memref<128x128xf32, #tpu.memory_space<vmem>>, vector<128x128xf32>,
    %cst_12 = arith.constant dense<0.000000e+00> : vector<128x128xf32>
    %27 = tpu.matmul %2, %3, %cst_12 {dimension_numbers = #tpu.dot_dimension_numbers<[1], [0], [0], [1], [0, 0, 1, 1], [], []>} : vector<128x32xf32>, vector<32x128xf32>, vector<128x128xf32> -> vector<128x128xf32>
    %c0_13 = arith.constant 0 : index
    %c0_14 = arith.constant 0 : index
    %28 = vector.load %arg7[%c0_13, %c0_14] : memref<128x128xf32, #tpu.memory_space<vmem>>, vector<128x128xf32>
    tpu.vector_store %arg7[%c0_13, %c0_14], %27 {strides = array<i32>} : memref<128x128xf32, #tpu.memory_space<vmem>>, vector<128x128xf32>,
    %29 = arith.subf %25, %27 : vector<128x128xf32>
    %30 = arith.mulf %29, %29 : vector<128x128xf32>
    %31 = vector.shape_cast %30 : vector<128x128xf32> to vector<1x128x128xf32>
    %cst_15 = arith.constant dense<0.000000e+00> : vector<1xf32>
    %32 = vector.multi_reduction <add>, %31, %cst_15 [1, 2] : vector<1x128x128xf32> to vector<1xf32>
    %33 = vector.shape_cast %32 : vector<1xf32> to vector<1x1x1xf32>
    %34 = vector.extract %33[0, 0, 0] : f32 from vector<1x1x1xf32>
    %35 = vector.broadcast %34 : f32 to vector<1x1xf32>
    %36 = arith.mulf %2, %2 : vector<128x32xf32>
    %37 = vector.shape_cast %36 : vector<128x32xf32> to vector<1x128x32xf32>
    %cst_16 = arith.constant dense<0.000000e+00> : vector<1xf32>
    %38 = vector.multi_reduction <add>, %37, %cst_16 [1, 2] : vector<1x128x32xf32> to vector<1xf32>
    %39 = vector.shape_cast %38 : vector<1xf32> to vector<1x1x1xf32>
    %40 = vector.extract %39[0, 0, 0] : f32 from vector<1x1x1xf32>
    %41 = vector.broadcast %40 : f32 to vector<1x1xf32>
    %c0_i32 = arith.constant 0 : i32
    %42 = arith.cmpi eq, %arg1, %c0_i32 : i32
    %cst_17 = arith.constant 8.000000e-01 : f32
    %cst_18 = arith.constant 0.000000e+00 : f32
    %43 = arith.select %42, %cst_17, %cst_18 : f32
    %44 = vector.broadcast %43 : f32 to vector<1x1xf32>
    %45 = arith.mulf %44, %41 : vector<1x1xf32>
    %46 = arith.addf %35, %45 : vector<1x1xf32>
    %47 = vector.shape_cast %46 : vector<1x1xf32> to vector<1x1xf32>
    %48 = vector.broadcast %47 : vector<1x1xf32> to vector<8x128xf32>
    %c0_19 = arith.constant 0 : index
    %c0_20 = arith.constant 0 : index
    %49 = vector.load %arg8[%c0_19, %c0_20] : memref<8x128xf32, #tpu.memory_space<vmem>>, vector<8x128xf32>
    tpu.vector_store %arg8[%c0_19, %c0_20], %48 {strides = array<i32>} : memref<8x128xf32, #tpu.memory_space<vmem>>, vector<8x128xf32>,
    return
  }
  func.func @transform_0(%arg0: i32, %arg1: i32) -> (i32, i32) {
    %c0_i32 = arith.constant 0 : i32
    %c0_i32_0 = arith.constant 0 : i32
    return %arg0, %c0_i32 : i32, i32
  }
  func.func @transform_1(%arg0: i32, %arg1: i32) -> (i32, i32) {
    %c0_i32 = arith.constant 0 : i32
    %c0_i32_0 = arith.constant 0 : i32
    return %c0_i32, %arg1 : i32, i32
  }
  func.func @transform_2(%arg0: i32, %arg1: i32) -> (i32, i32) {
    %c0_i32 = arith.constant 0 : i32
    %c0_i32_0 = arith.constant 0 : i32
    return %arg0, %c0_i32 : i32, i32
  }
  func.func @transform_3(%arg0: i32, %arg1: i32) -> (i32, i32) {
    %c0_i32 = arith.constant 0 : i32
    %c0_i32_0 = arith.constant 0 : i32
    return %c0_i32, %arg1 : i32, i32
  }
  func.func @transform_4(%arg0: i32, %arg1: i32) -> (i32, i32) {
    %c0_i32 = arith.constant 0 : i32
    return %arg0, %arg1 : i32, i32
  }
  func.func @transform_5(%arg0: i32, %arg1: i32) -> (i32, i32) {
    %c0_i32 = arith.constant 0 : i32
    return %arg0, %arg1 : i32, i32
  }
  func.func @transform_6(%arg0: i32, %arg1: i32) -> (i32, i32) {
    %c0_i32 = arith.constant 0 : i32
    return %arg0, %arg1 : i32, i32
  }
}

</mosaic_0001>

<llo_original>
// kernel: tpu_custom_call.1
$region0: #{tpu_custom_call.1}
  #allocation0 [shape = 'u32[]', space=smem, size = 0x4, offset = 0x4, fixed_abs, tag = 'smem constant byte address 0x4 - core index']
  #allocation1 [shape = 'u32[144,128]{1,0:T(1,128)}', space=vmem, size = 0x12000, scoped, tag = 'internal scratch']
  %s0 = inlined_call_operand.vmem [shape: f32[256,2], index: 0, kind: input, shape index: {}]
  %s1 = inlined_call_operand.vmem [shape: f32[2,256], index: 1, kind: input, shape index: {}]
  %s2 = inlined_call_operand.vmem [shape: f32[256,32], index: 2, kind: input, shape index: {}]
  %s3 = inlined_call_operand.vmem [shape: f32[32,256], index: 3, kind: input, shape index: {}]
  %s4 = inlined_call_operand.hbm [shape: f32[256,256], index: 4, kind: output, shape index: {0}]
  %s5 = inlined_call_operand.hbm [shape: f32[256,256], index: 5, kind: output, shape index: {1}]
  %s6 = inlined_call_operand.hbm [shape: f32[16,256], index: 6, kind: output, shape index: {2}]
  %7 = xla_tuple %s4, %s5, %s6
  %s8 = sld [smem:[#allocation0]]
  $region103: #{tpu_custom_call.1} parent=0
    _
  %s10 = ssub.s32 1, %s8
  %s11 = scalar_select 0, %s10, %s8
  $region1: #{tpu_custom_call.1} parent=0
    #allocation2 [shape = 'u8[32768]{0}', space=vmem, size = 0x8000, scoped, tag = 'input window, operand 3']
    #allocation3 [shape = 'u8[131072]{0}', space=vmem, size = 0x20000, scoped, tag = 'output window, operand 0']
    #allocation4 [shape = 's32[2]{0}', space=sflag, size = 0x8, scoped, tag = 'scoped memory for tpu_custom_call.1']
    #allocation5 [shape = 'u8[131072]{0}', space=vmem, size = 0x20000, scoped, tag = 'output window, operand 1']
    #allocation6 [shape = 's32[2]{0}', space=sflag, size = 0x8, scoped, tag = 'scoped memory for tpu_custom_call.1']
    #allocation7 [shape = 'u8[8192]{0}', space=vmem, size = 0x2000, scoped, tag = 'output window, operand 2']
    %12 = vsyncpa [#allocation4], 0
    %s13 = scalar_lea.sflag [#allocation4], 1
    %14 = vsyncpa %s13, 0
    %15 = vsyncpa [#allocation6], 0
    %s16 = scalar_lea.sflag [#allocation6], 1
    %17 = vsyncpa %s16, 0
    loop: start=0, step=1, limit=6
    $region2: #{tpu_custom_call.1} parent=1 // loop_pre_header
      _
    $region3: #{tpu_custom_call.1} parent=1 // loop_header
      %s19 = sphi 0, %s23
      %p20 = scmp.ge.s32.totalorder %s19, 6
      %s26 = sphi 0, %s38
      %s27 = sphi 0, %s34
      %s28 = sphi 0, %s26
      %s29 = sphi 0, %s27
      %s30 = sphi 0, %s28
      %s31 = sphi 0, %s29
      %s41 = sphi 0, %s43
      %s44 = sphi 0, %s41
      %s45 = sphi 0, %s44
      %s61 = sphi 0, %s45
      %s67 = sphi 0, %s69
      %s70 = sphi 0, %s67
      %s71 = sphi 0, %s70
      %s87 = sphi 0, %s71
      %s93 = sphi 0, %s95
      %s96 = sphi 0, %s93
      %s97 = sphi 0, %s96
      %s113 = sphi 0, %s97
      %s119 = sphi 0, %s121
      %s122 = sphi 0, %s119
      %s123 = sphi 0, %s122
      %s139 = sphi 0, %s123
      %s147 = sphi 0, %s149
      %s150 = sphi 0, %s147
      %s151 = sphi 0, %s150
      %s167 = sphi 0, %s151
      %s175 = sphi 0, %s177
      %s178 = sphi 0, %s175
      %s179 = sphi 0, %s178
      %s195 = sphi 0, %s179
      %s203 = sphi 0, %s205
      %s206 = sphi 0, %s203
      %s207 = sphi 0, %s206
      %s223 = sphi 0, %s207
    $region4: #{tpu_custom_call.1} parent=1 // loop_header_branch
      %22 = sbr.rel (%p20) target = $region8
    $region5: #{tpu_custom_call.1} parent=1 // loop_body
      %s24 = ssub.s32 %s19, 1
      %s25 = ssub.s32 %s19, 2
      %s32 = sadd.s32 1, %s27
      %p33 = scmp.ge.s32.totalorder %s32, 2
      %s34 = scalar_select %p33, 0, %s32
      %s35 = sadd.s32 1, %s26
      %s36 = scalar_select %p33, %s35, %s26
      %p37 = scmp.ge.s32.totalorder %s36, 2
      %s38 = scalar_select %p37, 0, %s36
      %s39 = ssub.s32 %s26, %s38
      %p40 = scmp.eq.s32.totalorder %s39, 0
      %s42 = sadd.s32 %s41, 1
      %s43 = scalar_select %p40, %s41, %s42
      %p46 = pneg %p40
      %p47 = scmp.eq.s32.totalorder %s19, 3
      %p48 = por %p46, %p47
      %p49 = scmp.ne.s32.totalorder %s41, %s44
      %p50 = scmp.eq.s32.totalorder %s19, 0
      %p51 = por %p49, %p50
      %p52 = scmp.ne.s32.totalorder %s41, %s44
      %p53 = scmp.eq.s32.totalorder %s24, 3
      %p54 = por %p52, %p53
      %p55 = scmp.ne.s32.totalorder %s44, %s45
      %p56 = scmp.eq.s32.totalorder %s24, 0
      %p57 = por %p55, %p56
      %p58 = scmp.ne.s32.totalorder %s44, %s45
      %p59 = scmp.eq.s32.totalorder %s25, 3
      %p60 = por %p58, %p59
      %p62 = scmp.ne.s32.totalorder %s45, %s61
      %p63 = scmp.eq.s32.totalorder %s25, 0
      %p64 = por %p62, %p63
      %s65 = ssub.s32 %s27, %s34
      %p66 = scmp.eq.s32.totalorder %s65, 0
      %s68 = sadd.s32 %s67, 1
      %s69 = scalar_select %p66, %s67, %s68
      %p72 = pneg %p66
      %p73 = scmp.eq.s32.totalorder %s19, 3
      %p74 = por %p72, %p73
      %p75 = scmp.ne.s32.totalorder %s67, %s70
      %p76 = scmp.eq.s32.totalorder %s19, 0
      %p77 = por %p75, %p76
      %p78 = scmp.ne.s32.totalorder %s67, %s70
      %p79 = scmp.eq.s32.totalorder %s24, 3
      %p80 = por %p78, %p79
      %p81 = scmp.ne.s32.totalorder %s70, %s71
      %p82 = scmp.eq.s32.totalorder %s24, 0
      %p83 = por %p81, %p82
      %p84 = scmp.ne.s32.totalorder %s70, %s71
      %p85 = scmp.eq.s32.totalorder %s25, 3
      %p86 = por %p84, %p85
      %p88 = scmp.ne.s32.totalorder %s71, %s87
      %p89 = scmp.eq.s32.totalorder %s25, 0
      %p90 = por %p88, %p89
      %s91 = ssub.s32 %s26, %s38
      %p92 = scmp.eq.s32.totalorder %s91, 0
      %s94 = sadd.s32 %s93, 1
      %s95 = scalar_select %p92, %s93, %s94
      %p98 = pneg %p92
      %p99 = scmp.eq.s32.totalorder %s19, 3
      %p100 = por %p98, %p99
      %p101 = scmp.ne.s32.totalorder %s93, %s96
      %p102 = scmp.eq.s32.totalorder %s19, 0
      %p103 = por %p101, %p102
      %p104 = scmp.ne.s32.totalorder %s93, %s96
      %p105 = scmp.eq.s32.totalorder %s24, 3
      %p106 = por %p104, %p105
      %p107 = scmp.ne.s32.totalorder %s96, %s97
      %p108 = scmp.eq.s32.totalorder %s24, 0
      %p109 = por %p107, %p108
      %p110 = scmp.ne.s32.totalorder %s96, %s97
      %p111 = scmp.eq.s32.totalorder %s25, 3
      %p112 = por %p110, %p111
      %p114 = scmp.ne.s32.totalorder %s97, %s113
      %p115 = scmp.eq.s32.totalorder %s25, 0
      %p116 = por %p114, %p115
      %s117 = ssub.s32 %s27, %s34
      %p118 = scmp.eq.s32.totalorder %s117, 0
      %s120 = sadd.s32 %s119, 1
      %s121 = scalar_select %p118, %s119, %s120
      %p124 = pneg %p118
      %p125 = scmp.eq.s32.totalorder %s19, 3
      %p126 = por %p124, %p125
      %p127 = scmp.ne.s32.totalorder %s119, %s122
      %p128 = scmp.eq.s32.totalorder %s19, 0
      %p129 = por %p127, %p128
      %p130 = scmp.ne.s32.totalorder %s119, %s122
      %p131 = scmp.eq.s32.totalorder %s24, 3
      %p132 = por %p130, %p131
      %p133 = scmp.ne.s32.totalorder %s122, %s123
      %p134 = scmp.eq.s32.totalorder %s24, 0
      %p135 = por %p133, %p134
      %p136 = scmp.ne.s32.totalorder %s122, %s123
      %p137 = scmp.eq.s32.totalorder %s25, 3
      %p138 = por %p136, %p137
      %p140 = scmp.ne.s32.totalorder %s123, %s139
      %p141 = scmp.eq.s32.totalorder %s25, 0
      %p142 = por %p140, %p141
      %s143 = ssub.s32 %s26, %s38
      %s144 = ssub.s32 %s27, %s34
      %s145 = sor.u32 %s143, %s144
      %p146 = scmp.eq.s32.totalorder %s145, 0
      %s148 = sadd.s32 %s147, 1
      %s149 = scalar_select %p146, %s147, %s148
      %p152 = pneg %p146
      %p153 = scmp.eq.s32.totalorder %s19, 3
      %p154 = por %p152, %p153
      %p155 = scmp.ne.s32.totalorder %s147, %s150
      %p156 = scmp.eq.s32.totalorder %s19, 0
      %p157 = por %p155, %p156
      %p158 = scmp.ne.s32.totalorder %s147, %s150
      %p159 = scmp.eq.s32.totalorder %s24, 3
      %p160 = por %p158, %p159
      %p161 = scmp.ne.s32.totalorder %s150, %s151
      %p162 = scmp.eq.s32.totalorder %s24, 0
      %p163 = por %p161, %p162
      %p164 = scmp.ne.s32.totalorder %s150, %s151
      %p165 = scmp.eq.s32.totalorder %s25, 3
      %p166 = por %p164, %p165
      %p168 = scmp.ne.s32.totalorder %s151, %s167
      %p169 = scmp.eq.s32.totalorder %s25, 0
      %p170 = por %p168, %p169
      %s171 = ssub.s32 %s26, %s38
      %s172 = ssub.s32 %s27, %s34
      %s173 = sor.u32 %s171, %s172
      %p174 = scmp.eq.s32.totalorder %s173, 0
      %s176 = sadd.s32 %s175, 1
      %s177 = scalar_select %p174, %s175, %s176
      %p180 = pneg %p174
      %p181 = scmp.eq.s32.totalorder %s19, 3
      %p182 = por %p180, %p181
      %p183 = scmp.ne.s32.totalorder %s175, %s178
      %p184 = scmp.eq.s32.totalorder %s19, 0
      %p185 = por %p183, %p184
      %p186 = scmp.ne.s32.totalorder %s175, %s178
      %p187 = scmp.eq.s32.totalorder %s24, 3
      %p188 = por %p186, %p187
      %p189 = scmp.ne.s32.totalorder %s178, %s179
      %p190 = scmp.eq.s32.totalorder %s24, 0
      %p191 = por %p189, %p190
      %p192 = scmp.ne.s32.totalorder %s178, %s179
      %p193 = scmp.eq.s32.totalorder %s25, 3
      %p194 = por %p192, %p193
      %p196 = scmp.ne.s32.totalorder %s179, %s195
      %p197 = scmp.eq.s32.totalorder %s25, 0
      %p198 = por %p196, %p197
      %s199 = ssub.s32 %s26, %s38
      %s200 = ssub.s32 %s27, %s34
      %s201 = sor.u32 %s199, %s200
      %p202 = scmp.eq.s32.totalorder %s201, 0
      %s204 = sadd.s32 %s203, 1
      %s205 = scalar_select %p202, %s203, %s204
      %p208 = pneg %p202
      %p209 = scmp.eq.s32.totalorder %s19, 3
      %p210 = por %p208, %p209
      %p211 = scmp.ne.s32.totalorder %s203, %s206
      %p212 = scmp.eq.s32.totalorder %s19, 0
      %p213 = por %p211, %p212
      %p214 = scmp.ne.s32.totalorder %s203, %s206
      %p215 = scmp.eq.s32.totalorder %s24, 3
      %p216 = por %p214, %p215
      %p217 = scmp.ne.s32.totalorder %s206, %s207
      %p218 = scmp.eq.s32.totalorder %s24, 0
      %p219 = por %p217, %p218
      %p220 = scmp.ne.s32.totalorder %s206, %s207
      %p221 = scmp.eq.s32.totalorder %s25, 3
      %p222 = por %p220, %p221
      %p224 = scmp.ne.s32.totalorder %s207, %s223
      %p225 = scmp.eq.s32.totalorder %s25, 0
      %p226 = por %p224, %p225
      %p227 = scmp.le.s32.totalorder 1, %s19
      %p228 = scmp.lt.s32.totalorder %s19, 5
      %p229 = pnand %p227, %p228
      %p230 = pneg %p229
      // Predicated region
      $region9: #{tpu_custom_call.1} parent=5 // pred_check
        _
      $region10: #{tpu_custom_call.1} parent=5 // pred_check_branch
        %232 = sbr.rel (%p229) target = $region12
      $region11: #{tpu_custom_call.1} parent=5 // pred_region
        %s233 = ssub.s32 %s19, 1
      $region12: #{tpu_custom_call.1} parent=5 // pred_fallthru
        _
      %p234 = scmp.lt.s32.totalorder %s19, 4
      // Predicated region
      $region13: #{tpu_custom_call.1} parent=5 // pred_check
        %p235 = pneg %p234
      $region14: #{tpu_custom_call.1} parent=5 // pred_check_branch
        %237 = sbr.rel (%p235) target = $region16
      $region15: #{tpu_custom_call.1} parent=5 // pred_region
        // Predicated region
        $region17: #{tpu_custom_call.1} parent=15 // pred_check
          %p238 = pneg %p51
        $region18: #{tpu_custom_call.1} parent=15 // pred_check_branch
          %240 = sbr.rel (%p238) target = $region20
        $region19: #{tpu_custom_call.1} parent=15 // pred_region
          %s241 = smul.u32 16, %s26
          %p242 = scmp.lt.s32.totalorder %s241, 31
          %s243 = scalar_select %p242, %s241, 31
          %s244 = smul.addr %s243, 8
          %s245 = scalar_lea.vmem %s0, %s244
          %s246 = smul.u32 16, %s26
        $region20: #{tpu_custom_call.1} parent=15 // pred_fallthru
          _
        // Predicated region
        $region21: #{tpu_custom_call.1} parent=15 // pred_check
          %p247 = pneg %p77
        $region22: #{tpu_custom_call.1} parent=15 // pred_check_branch
          %249 = sbr.rel (%p247) target = $region24
        $region23: #{tpu_custom_call.1} parent=15 // pred_region
          %p250 = scmp.lt.s32.totalorder %s27, 1
          %s251 = scalar_select %p250, %s27, 1
          %s252 = smul.addr %s251, 2
          %s253 = scalar_lea.vmem %s1, %s252
        $region24: #{tpu_custom_call.1} parent=15 // pred_fallthru
          _
        // Predicated region
        $region25: #{tpu_custom_call.1} parent=15 // pred_check
          %p254 = pneg %p103
        $region26: #{tpu_custom_call.1} parent=15 // pred_check_branch
          %256 = sbr.rel (%p254) target = $region28
        $region27: #{tpu_custom_call.1} parent=15 // pred_region
          %s257 = smul.u32 16, %s26
          %p258 = scmp.lt.s32.totalorder %s257, 31
          %s259 = scalar_select %p258, %s257, 31
          %s260 = smul.addr %s259, 8
          %s261 = scalar_lea.vmem %s2, %s260
          %s262 = smul.u32 16, %s26
        $region28: #{tpu_custom_call.1} parent=15 // pred_fallthru
          _
        // Predicated region
        $region29: #{tpu_custom_call.1} parent=15 // pred_check
          %p263 = pneg %p129
        $region30: #{tpu_custom_call.1} parent=15 // pred_check_branch
          %265 = sbr.rel (%p263) target = $region32
        $region31: #{tpu_custom_call.1} parent=15 // pred_region
          %s266 = sand.u32 %s119, 1
          %s267 = sand.u32 %s119, 1
          %s268 = smul.addr %s267, 32
          %s269 = scalar_lea.vmem [#allocation2], %s268
          %s270 = smul.addr %s27, 8
          %s271 = scalar_lea.vmem %s3, %s270
          // Predicated region
          $region33: #{tpu_custom_call.1} parent=31 // pred_check
            _
          $region34: #{tpu_custom_call.1} parent=31 // pred_check_branch
            %273 = sbr.rel (0) target = $region36
          $region35: #{tpu_custom_call.1} parent=31 // pred_region
            // Predicated region
            $region37: #{tpu_custom_call.1} parent=35 // pred_check
              _
            $region38: #{tpu_custom_call.1} parent=35 // pred_check_branch
              %275 = sbr.rel (0) target = $region40
            $region39: #{tpu_custom_call.1} parent=35 // pred_region
              // Predicated region
              $region52: #{tpu_custom_call.1} parent=39 // pred_check
                _
              $region53: #{tpu_custom_call.1} parent=39 // pred_check_branch
                %296 = sbr.rel (0) target = $region55
              $region54: #{tpu_custom_call.1} parent=39 // pred_region
                loop: start=0, step=1, limit=1
                $region56: #{tpu_custom_call.1} parent=54 // loop_pre_header
                  _
                $region57: #{tpu_custom_call.1} parent=54 // loop_header
                  %s298 = sphi 0, %s302
                  %p299 = scmp.ge.s32.totalorder %s298, 1
                  %s303 = sphi %s271, %s271
                  %s304 = sphi %s269, %s269
                $region58: #{tpu_custom_call.1} parent=54 // loop_header_branch
                  %301 = sbr.rel (%p299) target = $region62
                $region59: #{tpu_custom_call.1} parent=54 // loop_body
                  %v305 = vld [vmem:[%s303] sm:$0xff]
                  %306 = vst [vmem:[%s304] sm:$0xff] %v305
                  %v307 = vld [vmem:[%s303 + $0x10] sm:$0xff]
                  %308 = vst [vmem:[%s304 + $0x8] sm:$0xff] %v307
                  %v309 = vld [vmem:[%s303 + $0x20] sm:$0xff]
                  %310 = vst [vmem:[%s304 + $0x10] sm:$0xff] %v309
                  %v311 = vld [vmem:[%s303 + $0x30] sm:$0xff]
                  %312 = vst [vmem:[%s304 + $0x18] sm:$0xff] %v311
                $region60: #{tpu_custom_call.1} parent=54 // loop_footer
                  %s302 = sadd.s32 1, %s298
                $region61: #{tpu_custom_call.1} parent=54 // loop_footer_branch
                  %297 = sbr.rel target = $region57
                $region62: #{tpu_custom_call.1} parent=54 // loop_exit
                  _
              $region55: #{tpu_custom_call.1} parent=39 // pred_fallthru
                _
              // Predicated region
              $region63: #{tpu_custom_call.1} parent=39 // pred_check
                _
              $region64: #{tpu_custom_call.1} parent=39 // pred_check_branch
                %314 = sbr.rel target = $region66
              $region65: #{tpu_custom_call.1} parent=39 // pred_region
                _
              $region66: #{tpu_custom_call.1} parent=39 // pred_fallthru
                _
            $region40: #{tpu_custom_call.1} parent=35 // pred_fallthru
              _
            // Predicated region
            $region41: #{tpu_custom_call.1} parent=35 // pred_check
              _
            $region42: #{tpu_custom_call.1} parent=35 // pred_check_branch
              %277 = sbr.rel target = $region44
            $region43: #{tpu_custom_call.1} parent=35 // pred_region
              loop: start=0, step=1, limit=1
              $region45: #{tpu_custom_call.1} parent=43 // loop_pre_header
                _
              $region46: #{tpu_custom_call.1} parent=43 // loop_header
                %s280 = sphi 0, %s284
                %p281 = scmp.ge.s32.totalorder %s280, 1
                %s285 = sphi %s271, %s271
                %s286 = sphi %s269, %s269
              $region47: #{tpu_custom_call.1} parent=43 // loop_header_branch
                %283 = sbr.rel (%p281) target = $region51
              $region48: #{tpu_custom_call.1} parent=43 // loop_body
                %v287 = vld [vmem:[%s285] sm:$0xff]
                %288 = vst [vmem:[%s286] sm:$0xff] %v287
                %v289 = vld [vmem:[%s285 + $0x10] sm:$0xff]
                %290 = vst [vmem:[%s286 + $0x8] sm:$0xff] %v289
                %v291 = vld [vmem:[%s285 + $0x20] sm:$0xff]
                %292 = vst [vmem:[%s286 + $0x10] sm:$0xff] %v291
                %v293 = vld [vmem:[%s285 + $0x30] sm:$0xff]
                %294 = vst [vmem:[%s286 + $0x18] sm:$0xff] %v293
              $region49: #{tpu_custom_call.1} parent=43 // loop_footer
                %s284 = sadd.s32 1, %s280
              $region50: #{tpu_custom_call.1} parent=43 // loop_footer_branch
                %279 = sbr.rel target = $region46
              $region51: #{tpu_custom_call.1} parent=43 // loop_exit
                _
            $region44: #{tpu_custom_call.1} parent=35 // pred_fallthru
              _
          $region36: #{tpu_custom_call.1} parent=31 // pred_fallthru
            _
          %315 = vnop
        $region32: #{tpu_custom_call.1} parent=15 // pred_fallthru
          _
      $region16: #{tpu_custom_call.1} parent=5 // pred_fallthru
        _
      %p316 = scmp.le.s32.totalorder 1, %s19
      %p317 = scmp.lt.s32.totalorder %s19, 5
      %p318 = pnand %p316, %p317
      %p319 = pneg %p318
      // Predicated region
      $region67: #{tpu_custom_call.1} parent=5 // pred_check
        _
      $region68: #{tpu_custom_call.1} parent=5 // pred_check_branch
        %321 = sbr.rel (%p318) target = $region70
      $region69: #{tpu_custom_call.1} parent=5 // pred_region
        %s322 = ssub.s32 %s19, 1
        %s323 = sand.u32 %s122, 1
        %s324 = sand.u32 %s122, 1
        %s325 = smul.addr %s324, 32
        %s326 = scalar_lea.vmem [#allocation2], %s325
        // Predicated region
        $region71: #{tpu_custom_call.1} parent=69 // pred_check
          %p327 = pneg %p135
        $region72: #{tpu_custom_call.1} parent=69 // pred_check_branch
          %329 = sbr.rel (%p327) target = $region74
        $region73: #{tpu_custom_call.1} parent=69 // pred_region
          _
        $region74: #{tpu_custom_call.1} parent=69 // pred_fallthru
          _
        %s330 = smul.u32 16, %s28
        %p331 = scmp.lt.s32.totalorder %s330, 31
        %s332 = scalar_select %p331, %s330, 31
        %s333 = smul.addr %s332, 8
        %s334 = scalar_lea.vmem %s0, %s333
        %p335 = pneg %p57
        %p336 = pneg %p54
        %p337 = scmp.lt.s32.totalorder %s29, 1
        %s338 = scalar_select %p337, %s29, 1
        %s339 = smul.addr %s338, 2
        %s340 = scalar_lea.vmem %s1, %s339
        %p341 = pneg %p83
        %p342 = pneg %p80
        %s343 = smul.u32 16, %s28
        %p344 = scmp.lt.s32.totalorder %s343, 31
        %s345 = scalar_select %p344, %s343, 31
        %s346 = smul.addr %s345, 8
        %s347 = scalar_lea.vmem %s2, %s346
        %p348 = pneg %p109
        %p349 = pneg %p106
        %s350 = sand.u32 %s122, 1
        %s351 = sand.u32 %s122, 1
        %s352 = smul.addr %s351, 32
        %s353 = scalar_lea.vmem [#allocation2], %s352
        %p354 = pneg %p135
        %p355 = pneg %p132
        %p356 = pneg %p163
        %p357 = pneg %p160
        %s358 = sand.u32 %s150, 1
        %s359 = scalar_lea.sflag [#allocation4], %s358
        %s360 = sand.u32 %s150, 1
        %s361 = smul.addr %s360, 128
        %s362 = scalar_lea.vmem [#allocation3], %s361
        %p363 = pneg %p191
        %p364 = pneg %p188
        %s365 = sand.u32 %s24, 1
        %s366 = scalar_lea.sflag [#allocation6], %s365
        %s367 = sand.u32 %s178, 1
        %s368 = smul.addr %s367, 128
        %s369 = scalar_lea.vmem [#allocation5], %s368
        %p370 = pneg %p219
        %p371 = pneg %p216
        %s372 = sand.u32 %s24, 1
        %s373 = scalar_lea.sflag [#allocation6], %s372
        %s374 = sand.u32 %s206, 1
        %s375 = smul.addr %s374, 8
        %s376 = scalar_lea.vmem [#allocation7], %s375
        %s377 = smul.u32 16, %s28
        %p378 = scmp.lt.s32.totalorder %s377, 31
        %s379 = scalar_select %p378, %s377, 31
        %s380 = smul.addr %s379, 8
        %s381 = scalar_lea.vmem %s0, %s380
        %s382 = smul.u32 16, %s28
        %p383 = scmp.lt.s32.totalorder %s29, 1
        %s384 = scalar_select %p383, %s29, 1
        %s385 = smul.addr %s384, 2
        %s386 = scalar_lea.vmem %s1, %s385
        %s387 = smul.u32 16, %s28
        %p388 = scmp.lt.s32.totalorder %s387, 31
        %s389 = scalar_select %p388, %s387, 31
        %s390 = smul.addr %s389, 8
        %s391 = scalar_lea.vmem %s2, %s390
        %s392 = smul.u32 16, %s28
        %s393 = smul.u32 16, %s28
        %s394 = smul.u32 16, %s28
        %v395 = vld [vmem:[%s381] sm:$0xff]
        %v396 = vld [vmem:[%s381 + $0x8] sm:$0xff]
        %v397 = vld [vmem:[%s381 + $0x10] sm:$0xff]
        %v398 = vld [vmem:[%s381 + $0x18] sm:$0xff]
        %v399 = vld [vmem:[%s381 + $0x20] sm:$0xff]
        %v400 = vld [vmem:[%s381 + $0x28] sm:$0xff]
        %v401 = vld [vmem:[%s381 + $0x30] sm:$0xff]
        %v402 = vld [vmem:[%s381 + $0x38] sm:$0xff]
        %v403 = vld [vmem:[%s381 + $0x40] sm:$0xff]
        %v404 = vld [vmem:[%s381 + $0x48] sm:$0xff]
        %v405 = vld [vmem:[%s381 + $0x50] sm:$0xff]
        %v406 = vld [vmem:[%s381 + $0x58] sm:$0xff]
        %v407 = vld [vmem:[%s381 + $0x60] sm:$0xff]
        %v408 = vld [vmem:[%s381 + $0x68] sm:$0xff]
        %v409 = vld [vmem:[%s381 + $0x70] sm:$0xff]
        %v410 = vld [vmem:[%s381 + $0x78] sm:$0xff]
        %v411 = vld [vmem:[%s386] sm:$0x3]
        %v412 = vld [vmem:[%s391] sm:$0xff]
        %v413 = vld [vmem:[%s391 + $0x8] sm:$0xff]
        %v414 = vld [vmem:[%s391 + $0x10] sm:$0xff]
        %v415 = vld [vmem:[%s391 + $0x18] sm:$0xff]
        %v416 = vld [vmem:[%s391 + $0x20] sm:$0xff]
        %v417 = vld [vmem:[%s391 + $0x28] sm:$0xff]
        %v418 = vld [vmem:[%s391 + $0x30] sm:$0xff]
        %v419 = vld [vmem:[%s391 + $0x38] sm:$0xff]
        %v420 = vld [vmem:[%s391 + $0x40] sm:$0xff]
        %v421 = vld [vmem:[%s391 + $0x48] sm:$0xff]
        %v422 = vld [vmem:[%s391 + $0x50] sm:$0xff]
        %v423 = vld [vmem:[%s391 + $0x58] sm:$0xff]
        %v424 = vld [vmem:[%s391 + $0x60] sm:$0xff]
        %v425 = vld [vmem:[%s391 + $0x68] sm:$0xff]
        %v426 = vld [vmem:[%s391 + $0x70] sm:$0xff]
        %v427 = vld [vmem:[%s391 + $0x78] sm:$0xff]
        %v428 = vld [vmem:[%s326] sm:$0xff]
        %v429 = vld [vmem:[%s326 + $0x8] sm:$0xff]
        %v430 = vld [vmem:[%s326 + $0x10] sm:$0xff]
        %v431 = vld [vmem:[%s326 + $0x18] sm:$0xff]
        %433 = vset.pattern.permute.xlu0 0
        %434 = vperm.xlu0 %433, %v395
        %v435 = vpop.permute.xlu0 %434
        %438 = vset.pattern.permute.xlu0 0
        %439 = vperm.xlu0 %438, %v396
        %v440 = vpop.permute.xlu0 %439
        %443 = vset.pattern.permute.xlu0 0
        %444 = vperm.xlu0 %443, %v397
        %v445 = vpop.permute.xlu0 %444
        %448 = vset.pattern.permute.xlu0 0
        %449 = vperm.xlu0 %448, %v398
        %v450 = vpop.permute.xlu0 %449
        %453 = vset.pattern.permute.xlu0 0
        %454 = vperm.xlu0 %453, %v399
        %v455 = vpop.permute.xlu0 %454
        %458 = vset.pattern.permute.xlu0 0
        %459 = vperm.xlu0 %458, %v400
        %v460 = vpop.permute.xlu0 %459
        %463 = vset.pattern.permute.xlu0 0
        %464 = vperm.xlu0 %463, %v401
        %v465 = vpop.permute.xlu0 %464
        %468 = vset.pattern.permute.xlu0 0
        %469 = vperm.xlu0 %468, %v402
        %v470 = vpop.permute.xlu0 %469
        %473 = vset.pattern.permute.xlu0 0
        %474 = vperm.xlu0 %473, %v403
        %v475 = vpop.permute.xlu0 %474
        %478 = vset.pattern.permute.xlu0 0
        %479 = vperm.xlu0 %478, %v404
        %v480 = vpop.permute.xlu0 %479
        %483 = vset.pattern.permute.xlu0 0
        %484 = vperm.xlu0 %483, %v405
        %v485 = vpop.permute.xlu0 %484
        %488 = vset.pattern.permute.xlu0 0
        %489 = vperm.xlu0 %488, %v406
        %v490 = vpop.permute.xlu0 %489
        %493 = vset.pattern.permute.xlu0 0
        %494 = vperm.xlu0 %493, %v407
        %v495 = vpop.permute.xlu0 %494
        %498 = vset.pattern.permute.xlu0 0
        %499 = vperm.xlu0 %498, %v408
        %v500 = vpop.permute.xlu0 %499
        %503 = vset.pattern.permute.xlu0 0
        %504 = vperm.xlu0 %503, %v409
        %v505 = vpop.permute.xlu0 %504
        %508 = vset.pattern.permute.xlu0 0
        %509 = vperm.xlu0 %508, %v410
        %v510 = vpop.permute.xlu0 %509
        %v512 = vlaneseq
        %v513 = vshrl.u32 %v512, 7
        %v514 = vsub.s32 0, %v513
        %v515 = vrot.slane %v411, %v514
        %v516 = vsub.f32 %v435, %v515
        %v517 = vsub.f32 %v440, %v515
        %v518 = vsub.f32 %v445, %v515
        %v519 = vsub.f32 %v450, %v515
        %v520 = vsub.f32 %v455, %v515
        %v521 = vsub.f32 %v460, %v515
        %v522 = vsub.f32 %v465, %v515
        %v523 = vsub.f32 %v470, %v515
        %v524 = vsub.f32 %v475, %v515
        %v525 = vsub.f32 %v480, %v515
        %v526 = vsub.f32 %v485, %v515
        %v527 = vsub.f32 %v490, %v515
        %v528 = vsub.f32 %v495, %v515
        %v529 = vsub.f32 %v500, %v515
        %v530 = vsub.f32 %v505, %v515
        %v531 = vsub.f32 %v510, %v515
        %v532 = vmul.f32 %v516, %v516
        %v533 = vmul.f32 %v517, %v517
        %v534 = vmul.f32 %v518, %v518
        %v535 = vmul.f32 %v519, %v519
        %v536 = vmul.f32 %v520, %v520
        %v537 = vmul.f32 %v521, %v521
        %v538 = vmul.f32 %v522, %v522
        %v539 = vmul.f32 %v523, %v523
        %v540 = vmul.f32 %v524, %v524
        %v541 = vmul.f32 %v525, %v525
        %v542 = vmul.f32 %v526, %v526
        %v543 = vmul.f32 %v527, %v527
        %v544 = vmul.f32 %v528, %v528
        %v545 = vmul.f32 %v529, %v529
        %v546 = vmul.f32 %v530, %v530
        %v547 = vmul.f32 %v531, %v531
        %548 = vset.pattern.permute.xlu0 1
        %549 = vperm.xlu0 %548, %v395
        %v550 = vpop.permute.xlu0 %549
        %552 = vset.pattern.permute.xlu0 1
        %553 = vperm.xlu0 %552, %v396
        %v554 = vpop.permute.xlu0 %553
        %556 = vset.pattern.permute.xlu0 1
        %557 = vperm.xlu0 %556, %v397
        %v558 = vpop.permute.xlu0 %557
        %560 = vset.pattern.permute.xlu0 1
        %561 = vperm.xlu0 %560, %v398
        %v562 = vpop.permute.xlu0 %561
        %564 = vset.pattern.permute.xlu0 1
        %565 = vperm.xlu0 %564, %v399
        %v566 = vpop.permute.xlu0 %565
        %568 = vset.pattern.permute.xlu0 1
        %569 = vperm.xlu0 %568, %v400
        %v570 = vpop.permute.xlu0 %569
        %572 = vset.pattern.permute.xlu0 1
        %573 = vperm.xlu0 %572, %v401
        %v574 = vpop.permute.xlu0 %573
        %576 = vset.pattern.permute.xlu0 1
        %577 = vperm.xlu0 %576, %v402
        %v578 = vpop.permute.xlu0 %577
        %580 = vset.pattern.permute.xlu0 1
        %581 = vperm.xlu0 %580, %v403
        %v582 = vpop.permute.xlu0 %581
        %584 = vset.pattern.permute.xlu0 1
        %585 = vperm.xlu0 %584, %v404
        %v586 = vpop.permute.xlu0 %585
        %588 = vset.pattern.permute.xlu0 1
        %589 = vperm.xlu0 %588, %v405
        %v590 = vpop.permute.xlu0 %589
        %592 = vset.pattern.permute.xlu0 1
        %593 = vperm.xlu0 %592, %v406
        %v594 = vpop.permute.xlu0 %593
        %596 = vset.pattern.permute.xlu0 1
        %597 = vperm.xlu0 %596, %v407
        %v598 = vpop.permute.xlu0 %597
        %600 = vset.pattern.permute.xlu0 1
        %601 = vperm.xlu0 %600, %v408
        %v602 = vpop.permute.xlu0 %601
        %604 = vset.pattern.permute.xlu0 1
        %605 = vperm.xlu0 %604, %v409
        %v606 = vpop.permute.xlu0 %605
        %608 = vset.pattern.permute.xlu0 1
        %609 = vperm.xlu0 %608, %v410
        %v610 = vpop.permute.xlu0 %609
        %v612 = vlaneseq
        %v613 = vshrl.u32 %v612, 7
        %v614 = vsub.s32 1, %v613
        %v615 = vrot.slane %v411, %v614
        %v616 = vsub.f32 %v550, %v615
        %v617 = vsub.f32 %v554, %v615
        %v618 = vsub.f32 %v558, %v615
        %v619 = vsub.f32 %v562, %v615
        %v620 = vsub.f32 %v566, %v615
        %v621 = vsub.f32 %v570, %v615
        %v622 = vsub.f32 %v574, %v615
        %v623 = vsub.f32 %v578, %v615
        %v624 = vsub.f32 %v582, %v615
        %v625 = vsub.f32 %v586, %v615
        %v626 = vsub.f32 %v590, %v615
        %v627 = vsub.f32 %v594, %v615
        %v628 = vsub.f32 %v598, %v615
        %v629 = vsub.f32 %v602, %v615
        %v630 = vsub.f32 %v606, %v615
        %v631 = vsub.f32 %v610, %v615
        %v632 = vmul.f32 %v616, %v616
        %v633 = vmul.f32 %v617, %v617
        %v634 = vmul.f32 %v618, %v618
        %v635 = vmul.f32 %v619, %v619
        %v636 = vmul.f32 %v620, %v620
        %v637 = vmul.f32 %v621, %v621
        %v638 = vmul.f32 %v622, %v622
        %v639 = vmul.f32 %v623, %v623
        %v640 = vmul.f32 %v624, %v624
        %v641 = vmul.f32 %v625, %v625
        %v642 = vmul.f32 %v626, %v626
        %v643 = vmul.f32 %v627, %v627
        %v644 = vmul.f32 %v628, %v628
        %v645 = vmul.f32 %v629, %v629
        %v646 = vmul.f32 %v630, %v630
        %v647 = vmul.f32 %v631, %v631
        %v648 = vadd.f32 %v532, %v632
        %v649 = vadd.f32 %v533, %v633
        %v650 = vadd.f32 %v534, %v634
        %v651 = vadd.f32 %v535, %v635
        %v652 = vadd.f32 %v536, %v636
        %v653 = vadd.f32 %v537, %v637
        %v654 = vadd.f32 %v538, %v638
        %v655 = vadd.f32 %v539, %v639
        %v656 = vadd.f32 %v540, %v640
        %v657 = vadd.f32 %v541, %v641
        %v658 = vadd.f32 %v542, %v642
        %v659 = vadd.f32 %v543, %v643
        %v660 = vadd.f32 %v544, %v644
        %v661 = vadd.f32 %v545, %v645
        %v662 = vadd.f32 %v546, %v646
        %v663 = vadd.f32 %v547, %v647
        %v664 = vsub.f32 0.0, %v648
        %v665 = vsub.f32 0.0, %v649
        %v666 = vsub.f32 0.0, %v650
        %v667 = vsub.f32 0.0, %v651
        %v668 = vsub.f32 0.0, %v652
        %v669 = vsub.f32 0.0, %v653
        %v670 = vsub.f32 0.0, %v654
        %v671 = vsub.f32 0.0, %v655
        %v672 = vsub.f32 0.0, %v656
        %v673 = vsub.f32 0.0, %v657
        %v674 = vsub.f32 0.0, %v658
        %v675 = vsub.f32 0.0, %v659
        %v676 = vsub.f32 0.0, %v660
        %v677 = vsub.f32 0.0, %v661
        %v678 = vsub.f32 0.0, %v662
        %v679 = vsub.f32 0.0, %v663
        %v680 = vmul.f32 %v664, 8.0
        %v681 = vmul.f32 %v665, 8.0
        %v682 = vmul.f32 %v666, 8.0
        %v683 = vmul.f32 %v667, 8.0
        %v684 = vmul.f32 %v668, 8.0
        %v685 = vmul.f32 %v669, 8.0
        %v686 = vmul.f32 %v670, 8.0
        %v687 = vmul.f32 %v671, 8.0
        %v688 = vmul.f32 %v672, 8.0
        %v689 = vmul.f32 %v673, 8.0
        %v690 = vmul.f32 %v674, 8.0
        %v691 = vmul.f32 %v675, 8.0
        %v692 = vmul.f32 %v676, 8.0
        %v693 = vmul.f32 %v677, 8.0
        %v694 = vmul.f32 %v678, 8.0
        %v695 = vmul.f32 %v679, 8.0
        %v696 = vmul.f32 %v680, 1.442695
        %v697 = vpow.pop %v696
        %v698 = vmul.f32 %v681, 1.442695
        %v699 = vpow.pop %v698
        %v700 = vmul.f32 %v682, 1.442695
        %v701 = vpow.pop %v700
        %v702 = vmul.f32 %v683, 1.442695
        %v703 = vpow.pop %v702
        %v704 = vmul.f32 %v684, 1.442695
        %v705 = vpow.pop %v704
        %v706 = vmul.f32 %v685, 1.442695
        %v707 = vpow.pop %v706
        %v708 = vmul.f32 %v686, 1.442695
        %v709 = vpow.pop %v708
        %v710 = vmul.f32 %v687, 1.442695
        %v711 = vpow.pop %v710
        %v712 = vmul.f32 %v688, 1.442695
        %v713 = vpow.pop %v712
        %v714 = vmul.f32 %v689, 1.442695
        %v715 = vpow.pop %v714
        %v716 = vmul.f32 %v690, 1.442695
        %v717 = vpow.pop %v716
        %v718 = vmul.f32 %v691, 1.442695
        %v719 = vpow.pop %v718
        %v720 = vmul.f32 %v692, 1.442695
        %v721 = vpow.pop %v720
        %v722 = vmul.f32 %v693, 1.442695
        %v723 = vpow.pop %v722
        %v724 = vmul.f32 %v694, 1.442695
        %v725 = vpow.pop %v724
        %v726 = vmul.f32 %v695, 1.442695
        %v727 = vpow.pop %v726
        %v728 = vmul.f32 %v697, 0.5
        %v729 = vmul.f32 %v699, 0.5
        %v730 = vmul.f32 %v701, 0.5
        %v731 = vmul.f32 %v703, 0.5
        %v732 = vmul.f32 %v705, 0.5
        %v733 = vmul.f32 %v707, 0.5
        %v734 = vmul.f32 %v709, 0.5
        %v735 = vmul.f32 %v711, 0.5
        %v736 = vmul.f32 %v713, 0.5
        %v737 = vmul.f32 %v715, 0.5
        %v738 = vmul.f32 %v717, 0.5
        %v739 = vmul.f32 %v719, 0.5
        %v740 = vmul.f32 %v721, 0.5
        %v741 = vmul.f32 %v723, 0.5
        %v742 = vmul.f32 %v725, 0.5
        %v743 = vmul.f32 %v727, 0.5
        %v744 = vadd.f32 %v728, 0.5
        %v745 = vadd.f32 %v729, 0.5
        %v746 = vadd.f32 %v730, 0.5
        %v747 = vadd.f32 %v731, 0.5
        %v748 = vadd.f32 %v732, 0.5
        %v749 = vadd.f32 %v733, 0.5
        %v750 = vadd.f32 %v734, 0.5
        %v751 = vadd.f32 %v735, 0.5
        %v752 = vadd.f32 %v736, 0.5
        %v753 = vadd.f32 %v737, 0.5
        %v754 = vadd.f32 %v738, 0.5
        %v755 = vadd.f32 %v739, 0.5
        %v756 = vadd.f32 %v740, 0.5
        %v757 = vadd.f32 %v741, 0.5
        %v758 = vadd.f32 %v742, 0.5
        %v759 = vadd.f32 %v743, 0.5
        %760 = vst [vmem:[%s362] sm:$0xff] %v744
        %761 = vst [vmem:[%s362 + $0x8] sm:$0xff] %v745
        %762 = vst [vmem:[%s362 + $0x10] sm:$0xff] %v746
        %763 = vst [vmem:[%s362 + $0x18] sm:$0xff] %v747
        %764 = vst [vmem:[%s362 + $0x20] sm:$0xff] %v748
        %765 = vst [vmem:[%s362 + $0x28] sm:$0xff] %v749
        %766 = vst [vmem:[%s362 + $0x30] sm:$0xff] %v750
        %767 = vst [vmem:[%s362 + $0x38] sm:$0xff] %v751
        %768 = vst [vmem:[%s362 + $0x40] sm:$0xff] %v752
        %769 = vst [vmem:[%s362 + $0x48] sm:$0xff] %v753
        %770 = vst [vmem:[%s362 + $0x50] sm:$0xff] %v754
        %771 = vst [vmem:[%s362 + $0x58] sm:$0xff] %v755
        %772 = vst [vmem:[%s362 + $0x60] sm:$0xff] %v756
        %773 = vst [vmem:[%s362 + $0x68] sm:$0xff] %v757
        %774 = vst [vmem:[%s362 + $0x70] sm:$0xff] %v758
        %775 = vst [vmem:[%s362 + $0x78] sm:$0xff] %v759
        %vm776 = vcmask 261120
        %v778 = vsel %vm776, %v412, 0
        %v781 = vsel %vm776, %v413, 0
        %v784 = vsel %vm776, %v414, 0
        %v787 = vsel %vm776, %v415, 0
        %v790 = vsel %vm776, %v416, 0
        %v793 = vsel %vm776, %v417, 0
        %v796 = vsel %vm776, %v418, 0
        %v799 = vsel %vm776, %v419, 0
        %v802 = vsel %vm776, %v420, 0
        %v805 = vsel %vm776, %v421, 0
        %v808 = vsel %vm776, %v422, 0
        %v811 = vsel %vm776, %v423, 0
        %v814 = vsel %vm776, %v424, 0
        %v817 = vsel %vm776, %v425, 0
        %v820 = vsel %vm776, %v426, 0
        %v823 = vsel %vm776, %v427, 0
        %825 = vmatprep.subr.mxu0 0.0
        %826 = vmatpush1.msra.mxu0 %v428
        %827 = vmatprep.subr.mxu0 0.0
        %828 = vmatpush1.msra.mxu0 %v429
        %829 = vmatprep.subr.mxu0 0.0
        %830 = vmatpush1.msra.mxu0 %v430
        %831 = vmatprep.subr.mxu0 0.0
        %832 = vmatpush1.msra.mxu0 %v431
        %833 = vmatprep.subr.mxu0 0.0
        %834 = vmatpush1.msra.mxu0 0.0
        %835 = vmatprep.subr.mxu0 0.0
        %836 = vmatpush1.msra.mxu0 0.0
        %837 = vmatprep.subr.mxu0 0.0
        %838 = vmatpush1.msra.mxu0 0.0
        %839 = vmatprep.subr.mxu0 0.0
        %840 = vmatpush1.msra.mxu0 0.0
        %841 = vmatprep.subr.mxu0 0.0
        %842 = vmatpush1.msra.mxu0 0.0
        %843 = vmatprep.subr.mxu0 0.0
        %844 = vmatpush1.msra.mxu0 0.0
        %845 = vmatprep.subr.mxu0 0.0
        %846 = vmatpush1.msra.mxu0 0.0
        %847 = vmatprep.subr.mxu0 0.0
        %848 = vmatpush1.msra.mxu0 0.0
        %849 = vmatprep.subr.mxu0 0.0
        %850 = vmatpush1.msra.mxu0 0.0
        %851 = vmatprep.subr.mxu0 0.0
        %852 = vmatpush1.msra.mxu0 0.0
        %853 = vmatprep.subr.mxu0 0.0
        %854 = vmatpush1.msra.mxu0 0.0
        %855 = vmatprep.subr.mxu0 0.0
        %856 = vmatpush1.msra.mxu0 0.0
        %857 = vmatprep.subr.mxu0 0.0
        %858 = vmatpush1.msra.mxu0 0.0
        %859 = vmatprep.subr.mxu0 0.0
        %860 = vmatpush1.msra.mxu0 0.0
        %861 = vmatprep.subr.mxu0 0.0
        %862 = vmatpush1.msra.mxu0 0.0
        %863 = vmatprep.subr.mxu0 0.0
        %864 = vmatpush1.msra.mxu0 0.0
        %865 = vmatprep.subr.mxu0 0.0
        %866 = vmatpush1.msra.mxu0 0.0
        %867 = vmatprep.subr.mxu0 0.0
        %868 = vmatpush1.msra.mxu0 0.0
        %869 = vmatprep.subr.mxu0 0.0
        %870 = vmatpush1.msra.mxu0 0.0
        %871 = vmatprep.subr.mxu0 0.0
        %872 = vmatpush1.msra.mxu0 0.0
        %873 = vmatprep.subr.mxu0 0.0
        %874 = vmatpush1.msra.mxu0 0.0
        %875 = vmatprep.subr.mxu0 0.0
        %876 = vmatpush1.msra.mxu0 0.0
        %877 = vmatprep.subr.mxu0 0.0
        %878 = vmatpush1.msra.mxu0 0.0
        %879 = vmatprep.subr.mxu0 0.0
        %880 = vmatpush1.msra.mxu0 0.0
        %881 = vmatprep.subr.mxu0 0.0
        %882 = vmatpush1.msra.mxu0 0.0
        %883 = vmatprep.subr.mxu0 0.0
        %884 = vmatpush1.msra.mxu0 0.0
        %885 = vmatprep.subr.mxu0 0.0
        %886 = vmatpush1.msra.mxu0 0.0
        %887 = vmatprep.subr.mxu0 0.0
        %888 = vmatpush1.msra.mxu0 0.0
        %889 = vmatprep.mubr.f32.mxu0 0.0
        %890 = vmatmul.mubr.f32.gmra.mrb[0].mxu0 %v778
        %v891 = vpop.f32.mrb[0].mxu0
        %v892 = vadd.f32 0.0, %v891
        %v893 = vpop.f32.mrb[0].mxu0
        %894 = vmatprep.mubr.f32.mxu0 0.0
        %895 = vmatmul.mubr.f32.gmra.mrb[0].mxu0 %v781
        %v896 = vpop.f32.mrb[0].mxu0
        %v897 = vadd.f32 0.0, %v896
        %v898 = vpop.f32.mrb[0].mxu0
        %899 = vmatprep.mubr.f32.mxu0 0.0
        %900 = vmatmul.mubr.f32.gmra.mrb[0].mxu0 %v784
        %v901 = vpop.f32.mrb[0].mxu0
        %v902 = vadd.f32 0.0, %v901
        %v903 = vpop.f32.mrb[0].mxu0
        %904 = vmatprep.mubr.f32.mxu0 0.0
        %905 = vmatmul.mubr.f32.gmra.mrb[0].mxu0 %v787
        %v906 = vpop.f32.mrb[0].mxu0
        %v907 = vadd.f32 0.0, %v906
        %v908 = vpop.f32.mrb[0].mxu0
        %909 = vmatprep.mubr.f32.mxu0 0.0
        %910 = vmatmul.mubr.f32.gmra.mrb[0].mxu0 %v790
        %v911 = vpop.f32.mrb[0].mxu0
        %v912 = vadd.f32 0.0, %v911
        %v913 = vpop.f32.mrb[0].mxu0
        %914 = vmatprep.mubr.f32.mxu0 0.0
        %915 = vmatmul.mubr.f32.gmra.mrb[0].mxu0 %v793
        %v916 = vpop.f32.mrb[0].mxu0
        %v917 = vadd.f32 0.0, %v916
        %v918 = vpop.f32.mrb[0].mxu0
        %919 = vmatprep.mubr.f32.mxu0 0.0
        %920 = vmatmul.mubr.f32.gmra.mrb[0].mxu0 %v796
        %v921 = vpop.f32.mrb[0].mxu0
        %v922 = vadd.f32 0.0, %v921
        %v923 = vpop.f32.mrb[0].mxu0
        %924 = vmatprep.mubr.f32.mxu0 0.0
        %925 = vmatmul.mubr.f32.gmra.mrb[0].mxu0 %v799
        %v926 = vpop.f32.mrb[0].mxu0
        %v927 = vadd.f32 0.0, %v926
        %v928 = vpop.f32.mrb[0].mxu0
        %929 = vmatprep.mubr.f32.mxu0 0.0
        %930 = vmatmul.mubr.f32.gmra.mrb[0].mxu0 %v802
        %v931 = vpop.f32.mrb[0].mxu0
        %v932 = vadd.f32 0.0, %v931
        %v933 = vpop.f32.mrb[0].mxu0
        %934 = vmatprep.mubr.f32.mxu0 0.0
        %935 = vmatmul.mubr.f32.gmra.mrb[0].mxu0 %v805
        %v936 = vpop.f32.mrb[0].mxu0
        %v937 = vadd.f32 0.0, %v936
        %v938 = vpop.f32.mrb[0].mxu0
        %939 = vmatprep.mubr.f32.mxu0 0.0
        %940 = vmatmul.mubr.f32.gmra.mrb[0].mxu0 %v808
        %v941 = vpop.f32.mrb[0].mxu0
        %v942 = vadd.f32 0.0, %v941
        %v943 = vpop.f32.mrb[0].mxu0
        %944 = vmatprep.mubr.f32.mxu0 0.0
        %945 = vmatmul.mubr.f32.gmra.mrb[0].mxu0 %v811
        %v946 = vpop.f32.mrb[0].mxu0
        %v947 = vadd.f32 0.0, %v946
        %v948 = vpop.f32.mrb[0].mxu0
        %949 = vmatprep.mubr.f32.mxu0 0.0
        %950 = vmatmul.mubr.f32.gmra.mrb[0].mxu0 %v814
        %v951 = vpop.f32.mrb[0].mxu0
        %v952 = vadd.f32 0.0, %v951
        %v953 = vpop.f32.mrb[0].mxu0
        %954 = vmatprep.mubr.f32.mxu0 0.0
        %955 = vmatmul.mubr.f32.gmra.mrb[0].mxu0 %v817
        %v956 = vpop.f32.mrb[0].mxu0
        %v957 = vadd.f32 0.0, %v956
        %v958 = vpop.f32.mrb[0].mxu0
        %959 = vmatprep.mubr.f32.mxu0 0.0
        %960 = vmatmul.mubr.f32.gmra.mrb[0].mxu0 %v820
        %v961 = vpop.f32.mrb[0].mxu0
        %v962 = vadd.f32 0.0, %v961
        %v963 = vpop.f32.mrb[0].mxu0
        %964 = vmatprep.mubr.f32.mxu0 0.0
        %965 = vmatmul.mubr.f32.gmra.mrb[0].mxu0 %v823
        %v966 = vpop.f32.mrb[0].mxu0
        %v967 = vadd.f32 0.0, %v966
        %v968 = vpop.f32.mrb[0].mxu0
        %969 = vdwg.mxu0
        %970 = vst [vmem:[%s369] sm:$0xff] %v892
        %971 = vst [vmem:[%s369 + $0x8] sm:$0xff] %v897
        %972 = vst [vmem:[%s369 + $0x10] sm:$0xff] %v902
        %973 = vst [vmem:[%s369 + $0x18] sm:$0xff] %v907
        %974 = vst [vmem:[%s369 + $0x20] sm:$0xff] %v912
        %975 = vst [vmem:[%s369 + $0x28] sm:$0xff] %v917
        %976 = vst [vmem:[%s369 + $0x30] sm:$0xff] %v922
        %977 = vst [vmem:[%s369 + $0x38] sm:$0xff] %v927
        %978 = vst [vmem:[%s369 + $0x40] sm:$0xff] %v932
        %979 = vst [vmem:[%s369 + $0x48] sm:$0xff] %v937
        %980 = vst [vmem:[%s369 + $0x50] sm:$0xff] %v942
        %981 = vst [vmem:[%s369 + $0x58] sm:$0xff] %v947
        %982 = vst [vmem:[%s369 + $0x60] sm:$0xff] %v952
        %983 = vst [vmem:[%s369 + $0x68] sm:$0xff] %v957
        %984 = vst [vmem:[%s369 + $0x70] sm:$0xff] %v962
        %985 = vst [vmem:[%s369 + $0x78] sm:$0xff] %v967
        %v986 = vsub.f32 %v744, %v892
        %v987 = vsub.f32 %v745, %v897
        %v988 = vsub.f32 %v746, %v902
        %v989 = vsub.f32 %v747, %v907
        %v990 = vsub.f32 %v748, %v912
        %v991 = vsub.f32 %v749, %v917
        %v992 = vsub.f32 %v750, %v922
        %v993 = vsub.f32 %v751, %v927
        %v994 = vsub.f32 %v752, %v932
        %v995 = vsub.f32 %v753, %v937
        %v996 = vsub.f32 %v754, %v942
        %v997 = vsub.f32 %v755, %v947
        %v998 = vsub.f32 %v756, %v952
        %v999 = vsub.f32 %v757, %v957
        %v1000 = vsub.f32 %v758, %v962
        %v1001 = vsub.f32 %v759, %v967
        %v1002 = vmul.f32 %v986, %v986
        %v1003 = vmul.f32 %v987, %v987
        %v1004 = vmul.f32 %v988, %v988
        %v1005 = vmul.f32 %v989, %v989
        %v1006 = vmul.f32 %v990, %v990
        %v1007 = vmul.f32 %v991, %v991
        %v1008 = vmul.f32 %v992, %v992
        %v1009 = vmul.f32 %v993, %v993
        %v1010 = vmul.f32 %v994, %v994
        %v1011 = vmul.f32 %v995, %v995
        %v1012 = vmul.f32 %v996, %v996
        %v1013 = vmul.f32 %v997, %v997
        %v1014 = vmul.f32 %v998, %v998
        %v1015 = vmul.f32 %v999, %v999
        %v1016 = vmul.f32 %v1000, %v1000
        %v1017 = vmul.f32 %v1001, %v1001
        %v1018 = vadd.f32 %v1002, %v1003
        %v1019 = vadd.f32 %v1018, %v1004
        %v1020 = vadd.f32 %v1019, %v1005
        %v1021 = vadd.f32 %v1020, %v1006
        %v1022 = vadd.f32 %v1021, %v1007
        %v1023 = vadd.f32 %v1022, %v1008
        %v1024 = vadd.f32 %v1023, %v1009
        %v1025 = vadd.f32 %v1024, %v1010
        %v1026 = vadd.f32 %v1025, %v1011
        %v1027 = vadd.f32 %v1026, %v1012
        %v1028 = vadd.f32 %v1027, %v1013
        %v1029 = vadd.f32 %v1028, %v1014
        %v1030 = vadd.f32 %v1029, %v1015
        %v1031 = vadd.f32 %v1030, %v1016
        %v1032 = vadd.f32 %v1031, %v1017
        %1033 = vadd.xlane.f32.xlu0 %v1032
        %v1034 = vpop.xlane.xlu0 %1033
        %v1035 = vrot.slane %v1034, 4
        %v1036 = vadd.f32 %v1034, %v1035
        %v1037 = vrot.slane %v1036, 2
        %v1038 = vadd.f32 %v1036, %v1037
        %v1039 = vrot.slane %v1038, 1
        %v1040 = vadd.f32 %v1038, %v1039
        %s1041 = vtos %v1040
        %v1042 = vstv %s1041
        %v1043 = vmul.f32 %v412, %v412
        %v1044 = vmul.f32 %v413, %v413
        %v1045 = vmul.f32 %v414, %v414
        %v1046 = vmul.f32 %v415, %v415
        %v1047 = vmul.f32 %v416, %v416
        %v1048 = vmul.f32 %v417, %v417
        %v1049 = vmul.f32 %v418, %v418
        %v1050 = vmul.f32 %v419, %v419
        %v1051 = vmul.f32 %v420, %v420
        %v1052 = vmul.f32 %v421, %v421
        %v1053 = vmul.f32 %v422, %v422
        %v1054 = vmul.f32 %v423, %v423
        %v1055 = vmul.f32 %v424, %v424
        %v1056 = vmul.f32 %v425, %v425
        %v1057 = vmul.f32 %v426, %v426
        %v1058 = vmul.f32 %v427, %v427
        %v1059 = vsel %vm776, %v1043, 0.0
        %v1060 = vsel %vm776, %v1044, 0.0
        %v1061 = vadd.f32 %v1059, %v1060
        %v1062 = vsel %vm776, %v1045, 0.0
        %v1063 = vadd.f32 %v1061, %v1062
        %v1064 = vsel %vm776, %v1046, 0.0
        %v1065 = vadd.f32 %v1063, %v1064
        %v1066 = vsel %vm776, %v1047, 0.0
        %v1067 = vadd.f32 %v1065, %v1066
        %v1068 = vsel %vm776, %v1048, 0.0
        %v1069 = vadd.f32 %v1067, %v1068
        %v1070 = vsel %vm776, %v1049, 0.0
        %v1071 = vadd.f32 %v1069, %v1070
        %v1072 = vsel %vm776, %v1050, 0.0
        %v1073 = vadd.f32 %v1071, %v1072
        %v1074 = vsel %vm776, %v1051, 0.0
        %v1075 = vadd.f32 %v1073, %v1074
        %v1076 = vsel %vm776, %v1052, 0.0
        %v1077 = vadd.f32 %v1075, %v1076
        %v1078 = vsel %vm776, %v1053, 0.0
        %v1079 = vadd.f32 %v1077, %v1078
        %v1080 = vsel %vm776, %v1054, 0.0
        %v1081 = vadd.f32 %v1079, %v1080
        %v1082 = vsel %vm776, %v1055, 0.0
        %v1083 = vadd.f32 %v1081, %v1082
        %v1084 = vsel %vm776, %v1056, 0.0
        %v1085 = vadd.f32 %v1083, %v1084
        %v1086 = vsel %vm776, %v1057, 0.0
        %v1087 = vadd.f32 %v1085, %v1086
        %v1088 = vsel %vm776, %v1058, 0.0
        %v1089 = vadd.f32 %v1087, %v1088
        %1090 = vadd.xlane.f32.xlu0 %v1089
        %v1091 = vpop.xlane.xlu0 %1090
        %v1092 = vrot.slane %v1091, 4
        %v1093 = vadd.f32 %v1091, %v1092
        %v1094 = vrot.slane %v1093, 2
        %v1095 = vadd.f32 %v1093, %v1094
        %v1096 = vrot.slane %v1095, 1
        %v1097 = vadd.f32 %v1095, %v1096
        %s1098 = vtos %v1097
        %v1099 = vstv %s1098
        %p1100 = scmp.eq.s32.totalorder %s29, 0
        %s1101 = scalar_select %p1100, 0.8, 0.0
        %v1102 = vstv %s1101
        %v1103 = vmul.f32 %v1102, %v1099
        %v1104 = vadd.f32 %v1042, %v1103
        %1105 = vst [vmem:[%s376] sm:$0xff] %v1104
        %s1106 = sand.u32 %s150, 1
        %s1107 = scalar_lea.sflag [#allocation4], %s1106
        %s1108 = sand.u32 %s150, 1
        %s1109 = smul.addr %s1108, 128
        %s1110 = scalar_lea.vmem [#allocation3], %s1109
        %s1111 = sand.u32 %s24, 1
        %s1112 = scalar_lea.sflag [#allocation6], %s1111
        %s1113 = sand.u32 %s178, 1
        %s1114 = smul.addr %s1113, 128
        %s1115 = scalar_lea.vmem [#allocation5], %s1114
        %s1116 = sand.u32 %s24, 1
        %s1117 = scalar_lea.sflag [#allocation6], %s1116
        %s1118 = sand.u32 %s206, 1
        %s1119 = smul.addr %s1118, 8
        %s1120 = scalar_lea.vmem [#allocation7], %s1119
        // Predicated region
        $region75: #{tpu_custom_call.1} parent=69 // pred_check
          %p1121 = pneg %p160
        $region76: #{tpu_custom_call.1} parent=69 // pred_check_branch
          %1123 = sbr.rel (%p1121) target = $region78
        $region77: #{tpu_custom_call.1} parent=69 // pred_region
          %s1124 = smul.u32 16, %s28
          %s1126 = ssub.s32 2048, 2048
          %1127 = vsyncadd %s1107, %s1126
          %s1128 = smul.addr %s1124, 2
          %s1129 = sadd.s32 %s29, %s1128
          %s1130 = smul.addr %s1129, 128
          %s1131 = scalar_lea.hbm %s4, %s1130
          %s1132 = sshll.u32 %s1110, 4
          %s1133 = int_to_ptr.vmem [resolvable:$true] %s1132
          %1138 = dma.vmem_to_hbm [thread:$0]  %s1133, 2048, %s1131, %s1107, 128, 256, 8
        $region78: #{tpu_custom_call.1} parent=69 // pred_fallthru
          _
        // Predicated region
        $region79: #{tpu_custom_call.1} parent=69 // pred_check
          %p1139 = pneg %p188
        $region80: #{tpu_custom_call.1} parent=69 // pred_check_branch
          %1141 = sbr.rel (%p1139) target = $region82
        $region81: #{tpu_custom_call.1} parent=69 // pred_region
          %s1142 = smul.u32 16, %s28
          %s1144 = ssub.s32 2048, 2048
          %1145 = vsyncadd %s1112, %s1144
          %s1146 = smul.addr %s1142, 2
          %s1147 = sadd.s32 %s29, %s1146
          %s1148 = smul.addr %s1147, 128
          %s1149 = scalar_lea.hbm %s5, %s1148
          %s1150 = sshll.u32 %s1115, 4
          %s1151 = int_to_ptr.vmem [resolvable:$true] %s1150
          %1156 = dma.vmem_to_hbm [thread:$0]  %s1151, 2048, %s1149, %s1112, 128, 256, 8
        $region82: #{tpu_custom_call.1} parent=69 // pred_fallthru
          _
        // Predicated region
        $region83: #{tpu_custom_call.1} parent=69 // pred_check
          %p1157 = pneg %p216
        $region84: #{tpu_custom_call.1} parent=69 // pred_check_branch
          %1159 = sbr.rel (%p1157) target = $region86
        $region85: #{tpu_custom_call.1} parent=69 // pred_region
          %s1161 = ssub.s32 128, 128
          %1162 = vsyncadd %s1117, %s1161
          %s1163 = smul.addr %s28, 2
          %s1164 = sadd.s32 %s29, %s1163
          %s1165 = smul.addr %s1164, 128
          %s1166 = scalar_lea.hbm %s6, %s1165
          %s1168 = sshll.u32 %s1120, 4
          %s1169 = int_to_ptr.vmem [resolvable:$true] %s1168
          %1171 = dma.vmem_to_hbm [thread:$0]  %s1169, 128, %s1166, %s1117
        $region86: #{tpu_custom_call.1} parent=69 // pred_fallthru
          _
      $region70: #{tpu_custom_call.1} parent=5 // pred_fallthru
        _
      %p1172 = scmp.le.s32.totalorder 2, %s19
      // Predicated region
      $region87: #{tpu_custom_call.1} parent=5 // pred_check
        %p1173 = pneg %p1172
      $region88: #{tpu_custom_call.1} parent=5 // pred_check_branch
        %1175 = sbr.rel (%p1173) target = $region90
      $region89: #{tpu_custom_call.1} parent=5 // pred_region
        %s1176 = ssub.s32 %s19, 2
        // Predicated region
        $region91: #{tpu_custom_call.1} parent=89 // pred_check
          %p1177 = pneg %p166
        $region92: #{tpu_custom_call.1} parent=89 // pred_check_branch
          %1179 = sbr.rel (%p1177) target = $region94
        $region93: #{tpu_custom_call.1} parent=89 // pred_region
          %s1180 = sand.u32 %s151, 1
          %s1181 = scalar_lea.sflag [#allocation4], %s1180
          %s1182 = sand.u32 %s151, 1
          %s1183 = smul.addr %s1182, 128
          %s1184 = scalar_lea.vmem [#allocation3], %s1183
          %1185 = dma.done %s1181, 2048
        $region94: #{tpu_custom_call.1} parent=89 // pred_fallthru
          _
        // Predicated region
        $region95: #{tpu_custom_call.1} parent=89 // pred_check
          %p1186 = pneg %p194
        $region96: #{tpu_custom_call.1} parent=89 // pred_check_branch
          %1188 = sbr.rel (%p1186) target = $region98
        $region97: #{tpu_custom_call.1} parent=89 // pred_region
          %s1189 = sand.u32 %s25, 1
          %s1190 = scalar_lea.sflag [#allocation6], %s1189
          %s1191 = sand.u32 %s179, 1
          %s1192 = smul.addr %s1191, 128
          %s1193 = scalar_lea.vmem [#allocation5], %s1192
          %1194 = dma.done %s1190, 2048
        $region98: #{tpu_custom_call.1} parent=89 // pred_fallthru
          _
        // Predicated region
        $region99: #{tpu_custom_call.1} parent=89 // pred_check
          %p1195 = pneg %p222
        $region100: #{tpu_custom_call.1} parent=89 // pred_check_branch
          %1197 = sbr.rel (%p1195) target = $region102
        $region101: #{tpu_custom_call.1} parent=89 // pred_region
          %s1198 = sand.u32 %s25, 1
          %s1199 = scalar_lea.sflag [#allocation6], %s1198
          %s1200 = sand.u32 %s207, 1
          %s1201 = smul.addr %s1200, 8
          %s1202 = scalar_lea.vmem [#allocation7], %s1201
          %1203 = dma.done %s1199, 128
        $region102: #{tpu_custom_call.1} parent=89 // pred_fallthru
          _
      $region90: #{tpu_custom_call.1} parent=5 // pred_fallthru
        _
    $region6: #{tpu_custom_call.1} parent=1 // loop_footer
      %s23 = sadd.s32 1, %s19
    $region7: #{tpu_custom_call.1} parent=1 // loop_footer_branch
      %18 = sbr.rel target = $region3
    $region8: #{tpu_custom_call.1} parent=1 // loop_exit
      _
    %1204 = vsyncpa [#allocation4], 1
    %s1205 = scalar_lea.sflag [#allocation4], 1
    %1206 = vsyncpa %s1205, 1
    %1207 = vsyncpa [#allocation6], 1
    %s1208 = scalar_lea.sflag [#allocation6], 1
    %1209 = vsyncpa %s1208, 1

</llo_original>
